<compile_context>
chip_gen: v5e
topology: v5e:2x2
jax: 0.10.0
libtpu: 0.0.40
codegen_flags: <defaults>
</compile_context>

<pallas_src>
import math

import jax
import jax.numpy as jnp
from jax.experimental import pallas as pl
from jax.experimental.pallas import tpu as pltpu


# Default tile plan (bf16 operands, f32 acc).  Double-buffered footprint at
# (512, 512, 1024) is ~7 MiB -- comfortable on v5e/v6e/v7x.
_TM_DEFAULT = 512
_TN_DEFAULT = 512
_TK_DEFAULT = 1024


def _round_up(x, m):
    return ((x + m - 1) // m) * m


def _fit_tile_128(t, padded):
    """Largest multiple of 128 that is <= t and divides `padded` (which is a
    multiple of 128); falls back to `padded` itself."""
    t = min(t, padded)
    t -= t % 128
    while t >= 128:
        if padded % t == 0:
            return t
        t -= 128
    return padded


def _linear_kernel(x_ref, w_ref, b_ref, o_ref, acc_ref):
    """3-D grid (i, j, k): K-accumulation into an f32 VMEM scratch."""
    k = pl.program_id(2)

    @pl.when(k == 0)
    def _():
        acc_ref[...] = jnp.zeros_like(acc_ref)

    acc_ref[...] += jnp.dot(x_ref[...], w_ref[...],
                            preferred_element_type=jnp.float32)

    @pl.when(k == pl.num_programs(2) - 1)
    def _():
        # Bias epilogue (f32), added exactly once, then one lane-dense store.
        o_ref[...] = (acc_ref[...] + b_ref[...]).astype(o_ref.dtype)


def _linear_kernel_1k(x_ref, w_ref, b_ref, o_ref):
    """Shallow-K fast path (single K tile): no scratch, no predication."""
    o_ref[...] = (jnp.dot(x_ref[...], w_ref[...],
                          preferred_element_type=jnp.float32)
                  + b_ref[...]).astype(o_ref.dtype)


def init_linear_params(key, input_size, output_size, dtype=jnp.float32):
    """Mirrors torch.nn.Linear default init. Returns weight [Out, In], bias [Out]."""
    kw, kb = jax.random.split(key)
    bound = 1.0 / math.sqrt(input_size)
    weight = jax.random.uniform(kw, (output_size, input_size), dtype,
                                minval=-bound, maxval=bound)
    bias = jax.random.uniform(kb, (output_size,), dtype,
                              minval=-bound, maxval=bound)
    return weight, bias


def pack_linear_params(weight, bias, *, tn=_TN_DEFAULT, tk=_TK_DEFAULT,
                       compute_dtype=jnp.bfloat16):
    """One-time layout/dtype prep: transpose to [In, Out], zero-pad K/N to
    128-aligned tile multiples, cast weight to the MXU compute dtype.  Done
    once so the per-call forward never touches the weight in the wrapper."""
    out_f, in_f = weight.shape
    tk = _fit_tile_128(tk, _round_up(in_f, 128))
    tn = _fit_tile_128(tn, _round_up(out_f, 128))
    k_pad = _round_up(in_f, tk)
    n_pad = _round_up(out_f, tn)
    w_packed = jnp.pad(weight.T, ((0, k_pad - in_f), (0, n_pad - out_f)))
    w_packed = w_packed.astype(compute_dtype)
    # Bias stays f32: epilogue add/cast runs on the VPU in f32 (v5e-safe).
    b_packed = jnp.pad(bias, (0, n_pad - out_f)).astype(jnp.float32)
    b_packed = b_packed.reshape(1, n_pad)
    return w_packed, b_packed


def linear_forward(x, w_packed, b_packed, out_features, *,
                   tm=_TM_DEFAULT, tn=_TN_DEFAULT, tk=_TK_DEFAULT,
                   compute_dtype=jnp.bfloat16):
    """y = x @ W.T + b  with W supplied pre-packed by pack_linear_params."""
    B, in_f = x.shape
    k_pad, n_pad = w_packed.shape
    assert in_f <= k_pad, "packed weight K dim smaller than input features"
    assert b_packed.shape == (1, n_pad)
    assert out_features <= n_pad

    out_dtype = x.dtype
    c_item = jnp.dtype(compute_dtype).itemsize
    out_item = jnp.dtype(out_dtype).itemsize

    # bf16 operands need a sublane multiple of 16 on the M axis (8 for f32).
    sub = 16 if c_item == 2 else 8
    tm = min(tm, _round_up(B, sub))
    m_pad = _round_up(B, tm)

    # Fit tiles to the packed (already 128-aligned) K / N extents.
    tk = _fit_tile_128(tk, k_pad)
    tn = _fit_tile_128(tn, n_pad)

    m_blocks = m_pad // tm
    n_blocks = n_pad // tn
    k_blocks = k_pad // tk

    # v7x megacore: guarantee >= 2 blocks along a "parallel" axis so both
    # TensorCores get work (no effect on single-TC v5e/v6e).
    if m_blocks == 1 and n_blocks == 1 and n_pad >= 256:
        tn = _fit_tile_128(n_pad // 2, n_pad)
        n_blocks = n_pad // tn

    # Per-call activation prep only (cheap: x is the small operand).
    x_p = x
    if m_pad != B or k_pad != in_f:
        x_p = jnp.pad(x_p, ((0, m_pad - B), (0, k_pad - in_f)))
    x_p = x_p.astype(compute_dtype)

    cost = pl.CostEstimate(
        flops=2 * m_pad * k_pad * n_pad,
        bytes_accessed=(x_p.size * c_item
                        + w_packed.size * jnp.dtype(w_packed.dtype).itemsize
                        + b_packed.size * 4
                        + m_pad * n_pad * out_item),
        transcendentals=0,
    )

    # Explicit scoped-VMEM budget: double-buffered x/W/out tiles + f32 acc.
    vmem_bytes = (2 * tm * tk * c_item + 2 * tk * tn * c_item
                  + 2 * tm * tn * out_item + tm * tn * 4 + 2 * tn * 4)
    vmem_limit = min(48 * 1024 * 1024,
                     max(32 * 1024 * 1024, int(vmem_bytes * 3 // 2)))

    if k_blocks == 1:
        out_p = pl.pallas_call(
            _linear_kernel_1k,
            out_shape=jax.ShapeDtypeStruct((m_pad, n_pad), out_dtype),
            grid_spec=pltpu.PrefetchScalarGridSpec(
                num_scalar_prefetch=0,
                grid=(m_blocks, n_blocks),
                in_specs=[
                    pl.BlockSpec((tm, tk), lambda i, j: (i, 0)),   # x tile
                    pl.BlockSpec((tk, tn), lambda i, j: (0, j)),   # W^T tile
                    pl.BlockSpec((1, tn), lambda i, j: (0, j)),    # bias tile
                ],
                out_specs=pl.BlockSpec((tm, tn), lambda i, j: (i, j)),
            ),
            compiler_params=pltpu.CompilerParams(
                dimension_semantics=("parallel", "parallel"),
                vmem_limit_bytes=vmem_limit,
            ),
            cost_estimate=cost,
        )(x_p, w_packed, b_packed)
    else:
        out_p = pl.pallas_call(
            _linear_kernel,
            out_shape=jax.ShapeDtypeStruct((m_pad, n_pad), out_dtype),
            grid_spec=pltpu.PrefetchScalarGridSpec(
                num_scalar_prefetch=0,
                grid=(m_blocks, n_blocks, k_blocks),
                in_specs=[
                    pl.BlockSpec((tm, tk), lambda i, j, k: (i, k)),  # x tile
                    pl.BlockSpec((tk, tn), lambda i, j, k: (k, j)),  # W^T tile
                    pl.BlockSpec((1, tn), lambda i, j, k: (0, j)),   # bias tile
                ],
                out_specs=pl.BlockSpec((tm, tn), lambda i, j, k: (i, j)),
                scratch_shapes=[pltpu.VMEM((tm, tn), jnp.float32)],
            ),
            compiler_params=pltpu.CompilerParams(
                dimension_semantics=("parallel", "parallel", "arbitrary"),
                vmem_limit_bytes=vmem_limit,
            ),
            cost_estimate=cost,
        )(x_p, w_packed, b_packed)

    if m_pad != B or n_pad != out_features:
        out_p = out_p[:B, :out_features]
    return out_p


if __name__ == "__main__":
    key = jax.random.PRNGKey(0)
    k_x1, k_p1, k_x2, k_p2 = jax.random.split(key, 4)

    # --- Test 1: small shape (single-K fast path, padded N/K, sliced back) ---
    batch, in_f, out_f = 8, 32, 16
    x1 = jax.random.normal(k_x1, (batch, in_f), jnp.float32)
    w1, b1 = init_linear_params(k_p1, in_f, out_f)
    w1_p, b1_p = pack_linear_params(w1, b1)

    y1 = linear_forward(x1, w1_p, b1_p, out_f)
    jax.block_until_ready(y1)
    ref1 = x1 @ w1.T + b1
    assert y1.shape == (batch, out_f)
    assert jnp.allclose(y1, ref1, atol=2e-2, rtol=2e-2), "test1 mismatch"

    # --- Test 2: K-accumulation path with multi-block M/N/K grid ---
    batch2, in_f2, out_f2 = 32, 384, 272
    x2 = jax.random.normal(k_x2, (batch2, in_f2), jnp.float32)
    w2, b2 = init_linear_params(k_p2, in_f2, out_f2)
    w2_p, b2_p = pack_linear_params(w2, b2)

    y2 = linear_forward(x2, w2_p, b2_p, out_f2, tm=16, tn=128, tk=128)
    jax.block_until_ready(y2)
    ref2 = x2 @ w2.T + b2
    assert y2.shape == (batch2, out_f2)
    assert jnp.allclose(y2, ref2, atol=2e-2, rtol=2e-2), "test2 mismatch"

    print("KERNEL_OK")
</pallas_src>

<mosaic_0001>
module attributes {stable_mosaic.version = 11 : i64} {
  func.func @_linear_kernel_1k(%arg0: i32, %arg1: i32, %arg2: memref<16x128xbf16, #tpu.memory_space<vmem>>, %arg3: memref<128x128xbf16, #tpu.memory_space<vmem>>, %arg4: memref<1x128xf32, #tpu.memory_space<vmem>>, %arg5: memref<16x128xf32, #tpu.memory_space<vmem>>) attributes {dimension_semantics = [#tpu.dimension_semantics<parallel>, #tpu.dimension_semantics<parallel>], iteration_bounds = array<i64: 1, 1>, scalar_prefetch = 0 : i64, scratch_operands = 0 : i64, tpu.core_type = #tpu.core_type<tc>, window_params = [{transform_indices = @transform_0, window_bounds = array<i64: 16, 128>}, {transform_indices = @transform_1, window_bounds = array<i64: 128, 128>}, {transform_indices = @transform_2, window_bounds = array<i64: 1, 128>}, {transform_indices = @transform_3, window_bounds = array<i64: 16, 128>}]} {
    %c0 = arith.constant 0 : index
    %c0_0 = arith.constant 0 : index
    %0 = vector.load %arg2[%c0, %c0_0] : memref<16x128xbf16, #tpu.memory_space<vmem>>, vector<16x128xbf16>
    %c0_1 = arith.constant 0 : index
    %c0_2 = arith.constant 0 : index
    %1 = vector.load %arg3[%c0_1, %c0_2] : memref<128x128xbf16, #tpu.memory_space<vmem>>, vector<128x128xbf16>
    %cst = arith.constant dense<0.000000e+00> : vector<16x128xf32>
    %2 = tpu.matmul %0, %1, %cst {dimension_numbers = #tpu.dot_dimension_numbers<[1], [0], [0], [1], [0, 0, 1, 1], [], []>} : vector<16x128xbf16>, vector<128x128xbf16>, vector<16x128xf32> -> vector<16x128xf32>
    %c0_3 = arith.constant 0 : index
    %c0_4 = arith.constant 0 : index
    %3 = vector.load %arg4[%c0_3, %c0_4] : memref<1x128xf32, #tpu.memory_space<vmem>>, vector<1x128xf32>
    %4 = vector.broadcast %3 : vector<1x128xf32> to vector<16x128xf32>
    %5 = arith.addf %2, %4 : vector<16x128xf32>
    %c0_5 = arith.constant 0 : index
    %c0_6 = arith.constant 0 : index
    %6 = vector.load %arg5[%c0_5, %c0_6] : memref<16x128xf32, #tpu.memory_space<vmem>>, vector<16x128xf32>
    tpu.vector_store %arg5[%c0_5, %c0_6], %5 {strides = array<i32>} : memref<16x128xf32, #tpu.memory_space<vmem>>, vector<16x128xf32>,
    return
  }
  func.func @transform_0(%arg0: i32, %arg1: i32) -> (i32, i32) {
    %c0_i32 = arith.constant 0 : i32
    %c0_i32_0 = arith.constant 0 : i32
    return %arg0, %c0_i32 : i32, i32
  }
  func.func @transform_1(%arg0: i32, %arg1: i32) -> (i32, i32) {
    %c0_i32 = arith.constant 0 : i32
    %c0_i32_0 = arith.constant 0 : i32
    return %c0_i32, %arg1 : i32, i32
  }
  func.func @transform_2(%arg0: i32, %arg1: i32) -> (i32, i32) {
    %c0_i32 = arith.constant 0 : i32
    %c0_i32_0 = arith.constant 0 : i32
    return %c0_i32, %arg1 : i32, i32
  }
  func.func @transform_3(%arg0: i32, %arg1: i32) -> (i32, i32) {
    %c0_i32 = arith.constant 0 : i32
    return %arg0, %arg1 : i32, i32
  }
}

</mosaic_0001>

<llo_original>
// kernel: tpu_custom_call.1
$region0: #{tpu_custom_call.1}
  #allocation0 [shape = 'u32[]', space=smem, size = 0x4, offset = 0x4, fixed_abs, tag = 'smem constant byte address 0x4 - core index']
  #allocation1 [shape = 'u32[72,128]{1,0:T(1,128)}', space=vmem, size = 0x9000, scoped, tag = 'internal scratch']
  %s0 = inlined_call_operand.hbm [shape: bf16[16,128], index: 0, kind: input, shape index: {}]
  %s1 = inlined_call_operand.hbm [shape: bf16[128,128], index: 1, kind: input, shape index: {}]
  %s2 = inlined_call_operand.vmem [shape: f32[1,128], index: 2, kind: input, shape index: {}]
  %s3 = inlined_call_operand.hbm [shape: f32[16,128], index: 3, kind: output, shape index: {}]
  %s4 = sld [smem:[#allocation0]]
  $region30: #{tpu_custom_call.1} parent=0
    _
  %s6 = ssub.s32 1, %s4
  %s7 = scalar_select 0, %s6, %s4
  $region1: #{tpu_custom_call.1} parent=0
    #allocation2 [shape = 'u8[4096]{0}', space=vmem, size = 0x1000, scoped, tag = 'input window, operand 0, single buffered']
    #allocation3 [shape = 's32[1]{0}', space=sflag, size = 0x4, scoped, tag = 'scoped memory for tpu_custom_call.1']
    #allocation4 [shape = 's32[1]{0}', space=sflag, size = 0x4, scoped, tag = 'scoped memory for tpu_custom_call.1']
    #allocation5 [shape = 'u8[32768]{0}', space=vmem, size = 0x8000, scoped, tag = 'input window, operand 1, single buffered']
    #allocation6 [shape = 's32[1]{0}', space=sflag, size = 0x4, scoped, tag = 'scoped memory for tpu_custom_call.1']
    #allocation7 [shape = 'u8[8192]{0}', space=vmem, size = 0x2000, scoped, tag = 'output window, operand 0, single buffered']
    %8 = vsyncpa [#allocation3], 0
    %9 = vsyncpa [#allocation6], 0
    %10 = vsyncpa [#allocation4], 0
    // Predicated region
    $region2: #{tpu_custom_call.1} parent=1 // pred_check
      _
    $region3: #{tpu_custom_call.1} parent=1 // pred_check_branch
      %12 = sbr.rel (0) target = $region5
    $region4: #{tpu_custom_call.1} parent=1 // pred_region
      %14 = vsyncadd [#allocation3], 0
      %s15 = sshll.u32 %s0, 4
      %s16 = int_to_ptr.hbm [resolvable:$true] %s15
      %s17 = sshll.u32 [#allocation2], 4
      %s18 = int_to_ptr.vmem [resolvable:$true] %s17
      %23 = dma.hbm_to_vmem [thread:$0]  %s16, 128, %s18, [#allocation3], 64, 64, 4
    $region5: #{tpu_custom_call.1} parent=1 // pred_fallthru
      _
    // Predicated region
    $region6: #{tpu_custom_call.1} parent=1 // pred_check
      _
    $region7: #{tpu_custom_call.1} parent=1 // pred_check_branch
      %25 = sbr.rel (0) target = $region9
    $region8: #{tpu_custom_call.1} parent=1 // pred_region
      %27 = vsyncadd [#allocation6], 0
      %s28 = sshll.u32 %s1, 4
      %s29 = int_to_ptr.hbm [resolvable:$true] %s28
      %s30 = sshll.u32 [#allocation5], 4
      %s31 = int_to_ptr.vmem [resolvable:$true] %s30
      %36 = dma.hbm_to_vmem [thread:$0]  %s29, 1024, %s31, [#allocation6], 64, 64, 4
    $region9: #{tpu_custom_call.1} parent=1 // pred_fallthru
      _
    // Predicated region
    $region10: #{tpu_custom_call.1} parent=1 // pred_check
      _
    $region11: #{tpu_custom_call.1} parent=1 // pred_check_branch
      %38 = sbr.rel (0) target = $region13
    $region12: #{tpu_custom_call.1} parent=1 // pred_region
      _
    $region13: #{tpu_custom_call.1} parent=1 // pred_fallthru
      _
    // Predicated region
    $region14: #{tpu_custom_call.1} parent=1 // pred_check
      _
    $region15: #{tpu_custom_call.1} parent=1 // pred_check_branch
      %40 = sbr.rel (0) target = $region17
    $region16: #{tpu_custom_call.1} parent=1 // pred_region
      %42 = dma.done [#allocation3], 128
    $region17: #{tpu_custom_call.1} parent=1 // pred_fallthru
      _
    // Predicated region
    $region18: #{tpu_custom_call.1} parent=1 // pred_check
      _
    $region19: #{tpu_custom_call.1} parent=1 // pred_check_branch
      %44 = sbr.rel (0) target = $region21
    $region20: #{tpu_custom_call.1} parent=1 // pred_region
      %46 = dma.done [#allocation6], 1024
    $region21: #{tpu_custom_call.1} parent=1 // pred_fallthru
      _
    %v47 = vld [vmem:[#allocation2] sm:$0xf]
    %v48 = vld [vmem:[#allocation2 + $0x4] sm:$0xf]
    %v49 = vld [vmem:[#allocation5] sm:$0xf]
    %v50 = vld [vmem:[#allocation5 + $0x4] sm:$0xf]
    %v51 = vld [vmem:[#allocation5 + $0x8] sm:$0xf]
    %v52 = vld [vmem:[#allocation5 + $0xc] sm:$0xf]
    %v53 = vld [vmem:[#allocation5 + $0x10] sm:$0xf]
    %v54 = vld [vmem:[#allocation5 + $0x14] sm:$0xf]
    %v55 = vld [vmem:[#allocation5 + $0x18] sm:$0xf]
    %v56 = vld [vmem:[#allocation5 + $0x1c] sm:$0xf]
    %v57 = vld [vmem:[#allocation5 + $0x20] sm:$0xf]
    %v58 = vld [vmem:[#allocation5 + $0x24] sm:$0xf]
    %v59 = vld [vmem:[#allocation5 + $0x28] sm:$0xf]
    %v60 = vld [vmem:[#allocation5 + $0x2c] sm:$0xf]
    %v61 = vld [vmem:[#allocation5 + $0x30] sm:$0xf]
    %v62 = vld [vmem:[#allocation5 + $0x34] sm:$0xf]
    %v63 = vld [vmem:[#allocation5 + $0x38] sm:$0xf]
    %v64 = vld [vmem:[#allocation5 + $0x3c] sm:$0xf]
    %v65 = vld [vmem:[%s2] sm:$0x1]
    %v67 = vperm.slane %v65, 0
    %v71 = vunpack.c.l.b16 %v47
    %v72 = vunpack.c.l.b16 %v48
    %v73 = vpack.c.b16 %v72, %v71
    %v91 = vunpack.c.l.b16 %v49
    %v92 = vunpack.c.l.b16 %v50
    %v93 = vunpack.c.l.b16 %v51
    %v94 = vunpack.c.l.b16 %v52
    %v95 = vunpack.c.l.b16 %v53
    %v96 = vunpack.c.l.b16 %v54
    %v97 = vunpack.c.l.b16 %v55
    %v98 = vunpack.c.l.b16 %v56
    %v99 = vunpack.c.l.b16 %v57
    %v100 = vunpack.c.l.b16 %v58
    %v101 = vunpack.c.l.b16 %v59
    %v102 = vunpack.c.l.b16 %v60
    %v103 = vunpack.c.l.b16 %v61
    %v104 = vunpack.c.l.b16 %v62
    %v105 = vunpack.c.l.b16 %v63
    %v106 = vunpack.c.l.b16 %v64
    %v107 = vpack.c.b16 %v92, %v91
    %v108 = vpack.c.b16 %v94, %v93
    %v109 = vpack.c.b16 %v96, %v95
    %v110 = vpack.c.b16 %v98, %v97
    %v111 = vpack.c.b16 %v100, %v99
    %v112 = vpack.c.b16 %v102, %v101
    %v113 = vpack.c.b16 %v104, %v103
    %v114 = vpack.c.b16 %v106, %v105
    %123 = vmatpush.bf16.msra.mxu0 %v114
    %124 = vmatpush.bf16.msra.mxu0 %v113
    %125 = vmatpush.bf16.msra.mxu0 %v112
    %126 = vmatpush.bf16.msra.mxu0 %v111
    %127 = vmatpush.bf16.msra.mxu0 %v110
    %128 = vmatpush.bf16.msra.mxu0 %v109
    %129 = vmatpush.bf16.msra.mxu0 %v108
    %130 = vmatpush.bf16.msra.mxu0 %v107
    %131 = vmatmul.bf16.gmra.mxu0 %v73
    %v132 = vpop.f32.mrf.mxu0
    %v133 = vadd.f32 %v67, %v132
    %v134 = vpop.f32.mrf.mxu0
    %v135 = vadd.f32 %v67, %v134
    %136 = vdwg.mxu0
    %137 = vst [vmem:[#allocation7] sm:$0xff] %v133
    %138 = vst [vmem:[#allocation7 + $0x8] sm:$0xff] %v135
    // Predicated region
    $region22: #{tpu_custom_call.1} parent=1 // pred_check
      _
    $region23: #{tpu_custom_call.1} parent=1 // pred_check_branch
      %140 = sbr.rel (0) target = $region25
    $region24: #{tpu_custom_call.1} parent=1 // pred_region
      %142 = vsyncadd [#allocation4], 0
      %s143 = sshll.u32 [#allocation7], 4
      %s144 = int_to_ptr.vmem [resolvable:$true] %s143
      %s145 = sshll.u32 %s3, 4
      %s146 = int_to_ptr.hbm [resolvable:$true] %s145
      %151 = dma.vmem_to_hbm [thread:$0]  %s144, 256, %s146, [#allocation4], 128, 128, 8
    $region25: #{tpu_custom_call.1} parent=1 // pred_fallthru
      _
    // Predicated region
    $region26: #{tpu_custom_call.1} parent=1 // pred_check
      _
    $region27: #{tpu_custom_call.1} parent=1 // pred_check_branch
      %153 = sbr.rel (0) target = $region29
    $region28: #{tpu_custom_call.1} parent=1 // pred_region
      %155 = dma.done [#allocation4], 256
    $region29: #{tpu_custom_call.1} parent=1 // pred_fallthru
      _
    %156 = vsyncpa [#allocation3], 1
    %157 = vsyncpa [#allocation6], 1
    %158 = vsyncpa [#allocation4], 1

</llo_original>
